<compile_context>
chip_gen: v7x
topology: tpu7x:2x2x1
jax: 0.10.0
libtpu: 0.0.40
codegen_flags: <defaults>
</compile_context>

<pallas_src>
import jax
import jax.numpy as jnp
from jax import lax
from jax.experimental import pallas as pl
from jax.experimental.pallas import tpu as pltpu

S_DIM = 3      # Pendulum-v1 observation dim
A_DIM = 1      # Pendulum-v1 action dim
H1 = 256
H2 = 64
RNN_H = 128
K_HEAD = 2 * RNN_H   # 256 = padded a2 (128) + h (128)


def _softplus(z):
    # matches torch.nn.Softplus (beta=1, threshold=20)
    return jnp.where(z > 20.0, z, jnp.log1p(jnp.exp(jnp.minimum(z, 20.0))))


def a3c_forward_kernel(
    x_ref,        # (B, S_DIM)
    h0_ref,       # (1, RNN_H)
    wxb_ref,      # (4, H1+RNN_H)        rows 0..2 = [w1 | wih], row 3 = [b1 | bih+bhh]
    w2b_ref,      # (264, 128)           rows 0..255 = w2 (lanes 64..127 zero), row 256 = b2
    whh_ref,      # (RNN_H, RNN_H)
    headsb_ref,   # (264, 128)           rows 0..63 = [wmu|wsig|0..], rows 128..255 = [0|0|wout|0..],
                  #                      row 256 = [bmu, bsig, bout, 0..]
    out_ref,      # (B_pad + 8, 128)     rows 0..B-1 = [mu|sigma|v|0..], rows B_pad..B_pad+7 = h_final
):
    B = x_ref.shape[0]
    B_pad = out_ref.shape[0] - 8

    x = x_ref[...]                                                     # (B, 3)

    # ---- fused actor-layer-1 / RNN-input projection: one MXU matmul + bias row ----
    xw = (jnp.dot(x, wxb_ref[0:S_DIM, :], preferred_element_type=jnp.float32)
          + wxb_ref[S_DIM:S_DIM + 1, :])                               # (B, 384)
    a1 = jnp.maximum(xw[:, :H1], 0.0)                                  # (B, 256)
    xw_rnn = xw[:, H1:]                                                # (B, 128) = x@wih + bih + bhh

    # ---- actor layer 2, padded to 128 lanes (lanes 64..127 are exactly 0) ----------
    a2 = jnp.maximum(
        jnp.dot(a1, w2b_ref[0:H1, :], preferred_element_type=jnp.float32)
        + w2b_ref[H1:H1 + 1, :],
        0.0)                                                           # (B, 128)

    # ---- critic recurrence: nn.RNN(tanh), seq_len = B, batch = 1 -------------------
    # Hidden state stays in vregs; B is small & static so the loop is fully unrolled
    # at trace time (static row slices, no per-step VMEM round-trip).  whh is hoisted
    # out of the loop so the compiler can keep it resident across steps.
    whh = whh_ref[...]
    h = h0_ref[...]                                                    # (1, 128)
    hs = []
    for t in range(B):
        h = jnp.tanh(xw_rnn[t:t + 1, :]
                     + jnp.dot(h, whh, preferred_element_type=jnp.float32))
        hs.append(h)
    h_all = jnp.concatenate(hs, axis=0)                                # (B, 128)

    # ---- all heads (mu, sigma, value) in ONE deferred lane-aligned matmul ----------
    cat = jnp.concatenate([a2, h_all], axis=-1)                        # (B, 256), vreg-aligned concat
    raw = (jnp.dot(cat, headsb_ref[0:K_HEAD, :], preferred_element_type=jnp.float32)
           + headsb_ref[K_HEAD:K_HEAD + 1, :])                         # (B, 128)
    # lane 0 = a2@wmu + bmu, lane 1 = a2@wsig + bsig, lane 2 = h@wout + bout, rest = 0

    mu_all = 2.0 * jnp.tanh(raw)
    sig_all = _softplus(raw) + 0.001
    lane = lax.broadcasted_iota(jnp.int32, raw.shape, 1)
    heads = jnp.where(lane == 0, mu_all, jnp.where(lane == 1, sig_all, raw))

    if B_pad != B:  # static trace-time pad so the store stays full-tile / unmasked
        heads = jnp.concatenate(
            [heads, jnp.zeros((B_pad - B, heads.shape[1]), heads.dtype)], axis=0)

    out_ref[0:B_pad, :] = heads                                        # lane-dense store
    out_ref[B_pad:B_pad + 8, :] = jnp.broadcast_to(h, (8, RNN_H))      # final hidden (row B_pad)


def pack_params(p):
    """Pack the 14 raw parameter arrays into 4 lane-dense kernel slabs.
    Called ONCE per weight update (hoisted out of the per-call path)."""
    wxb = jnp.concatenate([
        jnp.concatenate([p["w1"], p["wih"]], axis=1),                  # (3, 384)
        jnp.concatenate([p["b1"], p["bih"] + p["bhh"]], axis=1),       # (1, 384)
    ], axis=0)                                                         # (4, 384)

    w2b = jnp.zeros((264, 128), jnp.float32)
    w2b = w2b.at[0:H1, 0:H2].set(p["w2"])
    w2b = w2b.at[H1, 0:H2].set(p["b2"][0])

    headsb = jnp.zeros((264, 128), jnp.float32)
    headsb = headsb.at[0:H2, 0].set(p["wmu"][:, 0])
    headsb = headsb.at[0:H2, 1].set(p["wsig"][:, 0])
    headsb = headsb.at[RNN_H:RNN_H + RNN_H, 2].set(p["wout"][:, 0])
    headsb = headsb.at[K_HEAD, 0].set(p["bmu"][0, 0])
    headsb = headsb.at[K_HEAD, 1].set(p["bsig"][0, 0])
    headsb = headsb.at[K_HEAD, 2].set(p["bout"][0, 0])

    return dict(wxb=wxb, w2b=w2b, whh=p["whh"], headsb=headsb)


def _a3c_forward_impl(x, h0, packed):
    """Returns (a_mu, a_sigma, v, h_state) with PyTorch-matching shapes:
       (B, a_dim), (B, a_dim), (1, B, 1), (1, 1, 128)."""
    B = x.shape[0]
    B_pad = ((B + 7) // 8) * 8
    vmem = pl.BlockSpec(memory_space=pltpu.MemorySpace.VMEM)

    out = pl.pallas_call(
        a3c_forward_kernel,
        out_shape=jax.ShapeDtypeStruct((B_pad + 8, RNN_H), jnp.float32),
        in_specs=[vmem] * 6,
        out_specs=vmem,
    )(x, h0, packed["wxb"], packed["w2b"], packed["whh"], packed["headsb"])

    mu = out[0:B, 0:A_DIM]
    sigma = out[0:B, A_DIM:2 * A_DIM]
    v = out[0:B, 2 * A_DIM:2 * A_DIM + 1].reshape(1, B, 1)
    h = out[B_pad:B_pad + 1, :].reshape(1, 1, RNN_H)
    return mu, sigma, v, h


# jit the wrapper so the post-kernel slices/reshapes fuse with the pallas_call.
a3c_forward = jax.jit(_a3c_forward_impl)


def init_params(key):
    """Deterministic init, PyTorch-style uniform(-1/sqrt(fan_in), 1/sqrt(fan_in)).
       Weights stored as (in_features, out_features). Biases as (1, out)."""
    ks = jax.random.split(key, 16)

    def lin(kw, kb, fan_in, fan_out):
        bound = 1.0 / jnp.sqrt(fan_in)
        w = jax.random.uniform(kw, (fan_in, fan_out), jnp.float32, -bound, bound)
        b = jax.random.uniform(kb, (1, fan_out), jnp.float32, -bound, bound)
        return w, b

    p = {}
    p["w1"], p["b1"] = lin(ks[0], ks[1], S_DIM, H1)
    p["w2"], p["b2"] = lin(ks[2], ks[3], H1, H2)
    p["wmu"], p["bmu"] = lin(ks[4], ks[5], H2, A_DIM)
    p["wsig"], p["bsig"] = lin(ks[6], ks[7], H2, A_DIM)
    # nn.RNN params: uniform(-1/sqrt(hidden), 1/sqrt(hidden))
    rb = 1.0 / jnp.sqrt(RNN_H)
    p["wih"] = jax.random.uniform(ks[8], (S_DIM, RNN_H), jnp.float32, -rb, rb)
    p["bih"] = jax.random.uniform(ks[9], (1, RNN_H), jnp.float32, -rb, rb)
    p["whh"] = jax.random.uniform(ks[10], (RNN_H, RNN_H), jnp.float32, -rb, rb)
    p["bhh"] = jax.random.uniform(ks[11], (1, RNN_H), jnp.float32, -rb, rb)
    p["wout"], p["bout"] = lin(ks[12], ks[13], RNN_H, 1)
    return p


def ref_forward(x, h0, p):
    """Pure-JAX reference (mirrors the PyTorch forward) for validation."""
    a1 = jnp.maximum(x @ p["w1"] + p["b1"], 0.0)
    a2 = jnp.maximum(a1 @ p["w2"] + p["b2"], 0.0)
    mu = 2.0 * jnp.tanh(a2 @ p["wmu"] + p["bmu"])
    sigma = _softplus(a2 @ p["wsig"] + p["bsig"]) + 0.001

    def step(h, x_t):
        h_new = jnp.tanh(x_t[None, :] @ p["wih"] + p["bih"] + h @ p["whh"] + p["bhh"])
        v_t = h_new @ p["wout"] + p["bout"]
        return h_new, v_t[0]

    h, vs = lax.scan(step, h0, x)
    return mu, sigma, vs.reshape(1, x.shape[0], 1), h.reshape(1, 1, RNN_H)


if __name__ == "__main__":
    key = jax.random.PRNGKey(0)
    k_params, k_x = jax.random.split(key)

    B = 8  # batch of states == RNN sequence length in this module
    params = init_params(k_params)
    packed = jax.tree_util.tree_map(jnp.asarray, pack_params(params))  # hoisted: once per weight update
    x = jax.random.normal(k_x, (B, S_DIM), dtype=jnp.float32)
    h0 = jnp.zeros((1, RNN_H), dtype=jnp.float32)  # torch h_state=None -> zeros

    mu, sigma, v, h_state = jax.block_until_ready(a3c_forward(x, h0, packed))

    # validate against the pure-JAX reference
    mu_r, sigma_r, v_r, h_r = ref_forward(x, h0, params)
    assert mu.shape == (B, A_DIM) and sigma.shape == (B, A_DIM)
    assert v.shape == (1, B, 1) and h_state.shape == (1, 1, RNN_H)
    assert jnp.allclose(mu, mu_r, atol=1e-4)
    assert jnp.allclose(sigma, sigma_r, atol=1e-4)
    assert jnp.allclose(v, v_r, atol=1e-4)
    assert jnp.allclose(h_state, h_r, atol=1e-4)

    print("KERNEL_OK")
</pallas_src>

<mosaic_0001>
module attributes {stable_mosaic.version = 11 : i64} {
  func.func @a3c_forward_kernel(%arg0: memref<8x3xf32, #tpu.memory_space<vmem>>, %arg1: memref<1x128xf32, #tpu.memory_space<vmem>>, %arg2: memref<4x384xf32, #tpu.memory_space<vmem>>, %arg3: memref<264x128xf32, #tpu.memory_space<vmem>>, %arg4: memref<128x128xf32, #tpu.memory_space<vmem>>, %arg5: memref<264x128xf32, #tpu.memory_space<vmem>>, %arg6: memref<16x128xf32, #tpu.memory_space<vmem>>) attributes {dimension_semantics = [], scalar_prefetch = 0 : i64, scratch_operands = 0 : i64, tpu.core_type = #tpu.core_type<tc>} {
    %c0 = arith.constant 0 : index
    %c0_0 = arith.constant 0 : index
    %0 = vector.load %arg0[%c0, %c0_0] : memref<8x3xf32, #tpu.memory_space<vmem>>, vector<8x3xf32>
    %c0_1 = arith.constant 0 : index
    %c0_2 = arith.constant 0 : index
    %1 = vector.load %arg2[%c0_1, %c0_2] : memref<4x384xf32, #tpu.memory_space<vmem>>, vector<3x384xf32>
    %cst = arith.constant dense<0.000000e+00> : vector<8x384xf32>
    %2 = tpu.matmul %0, %1, %cst {dimension_numbers = #tpu.dot_dimension_numbers<[1], [0], [0], [1], [0, 0, 1, 1], [], []>} : vector<8x3xf32>, vector<3x384xf32>, vector<8x384xf32> -> vector<8x384xf32>
    %c3 = arith.constant 3 : index
    %c0_3 = arith.constant 0 : index
    %3 = vector.load %arg2[%c3, %c0_3] : memref<4x384xf32, #tpu.memory_space<vmem>>, vector<1x384xf32>
    %4 = vector.broadcast %3 : vector<1x384xf32> to vector<8x384xf32>
    %5 = arith.addf %2, %4 : vector<8x384xf32>
    %6 = vector.extract_strided_slice %5 {offsets = [0, 0], sizes = [8, 256], strides = [1, 1]} : vector<8x384xf32> to vector<8x256xf32>
    %cst_4 = arith.constant 0.000000e+00 : f32
    %7 = vector.broadcast %cst_4 : f32 to vector<8x256xf32>
    %8 = arith.maximumf %6, %7 : vector<8x256xf32>
    %9 = vector.extract_strided_slice %5 {offsets = [0, 256], sizes = [8, 128], strides = [1, 1]} : vector<8x384xf32> to vector<8x128xf32>
    %c0_5 = arith.constant 0 : index
    %c0_6 = arith.constant 0 : index
    %10 = vector.load %arg3[%c0_5, %c0_6] : memref<264x128xf32, #tpu.memory_space<vmem>>, vector<256x128xf32>
    %cst_7 = arith.constant dense<0.000000e+00> : vector<8x128xf32>
    %11 = tpu.matmul %8, %10, %cst_7 {dimension_numbers = #tpu.dot_dimension_numbers<[1], [0], [0], [1], [0, 0, 1, 1], [], []>} : vector<8x256xf32>, vector<256x128xf32>, vector<8x128xf32> -> vector<8x128xf32>
    %c256 = arith.constant 256 : index
    %c0_8 = arith.constant 0 : index
    %12 = vector.load %arg3[%c256, %c0_8] : memref<264x128xf32, #tpu.memory_space<vmem>>, vector<1x128xf32>
    %13 = vector.broadcast %12 : vector<1x128xf32> to vector<8x128xf32>
    %14 = arith.addf %11, %13 : vector<8x128xf32>
    %cst_9 = arith.constant 0.000000e+00 : f32
    %15 = vector.broadcast %cst_9 : f32 to vector<8x128xf32>
    %16 = arith.maximumf %14, %15 : vector<8x128xf32>
    %c0_10 = arith.constant 0 : index
    %c0_11 = arith.constant 0 : index
    %17 = vector.load %arg4[%c0_10, %c0_11] : memref<128x128xf32, #tpu.memory_space<vmem>>, vector<128x128xf32>
    %c0_12 = arith.constant 0 : index
    %c0_13 = arith.constant 0 : index
    %18 = vector.load %arg1[%c0_12, %c0_13] : memref<1x128xf32, #tpu.memory_space<vmem>>, vector<1x128xf32>
    %19 = vector.extract_strided_slice %9 {offsets = [0, 0], sizes = [1, 128], strides = [1, 1]} : vector<8x128xf32> to vector<1x128xf32>
    %cst_14 = arith.constant dense<0.000000e+00> : vector<1x128xf32>
    %20 = tpu.matmul %18, %17, %cst_14 {dimension_numbers = #tpu.dot_dimension_numbers<[1], [0], [0], [1], [0, 0, 1, 1], [], []>} : vector<1x128xf32>, vector<128x128xf32>, vector<1x128xf32> -> vector<1x128xf32>
    %21 = arith.addf %19, %20 : vector<1x128xf32>
    %22 = math.tanh %21 : vector<1x128xf32>
    %23 = vector.extract_strided_slice %9 {offsets = [1, 0], sizes = [1, 128], strides = [1, 1]} : vector<8x128xf32> to vector<1x128xf32>
    %cst_15 = arith.constant dense<0.000000e+00> : vector<1x128xf32>
    %24 = tpu.matmul %22, %17, %cst_15 {dimension_numbers = #tpu.dot_dimension_numbers<[1], [0], [0], [1], [0, 0, 1, 1], [], []>} : vector<1x128xf32>, vector<128x128xf32>, vector<1x128xf32> -> vector<1x128xf32>
    %25 = arith.addf %23, %24 : vector<1x128xf32>
    %26 = math.tanh %25 : vector<1x128xf32>
    %27 = vector.extract_strided_slice %9 {offsets = [2, 0], sizes = [1, 128], strides = [1, 1]} : vector<8x128xf32> to vector<1x128xf32>
    %cst_16 = arith.constant dense<0.000000e+00> : vector<1x128xf32>
    %28 = tpu.matmul %26, %17, %cst_16 {dimension_numbers = #tpu.dot_dimension_numbers<[1], [0], [0], [1], [0, 0, 1, 1], [], []>} : vector<1x128xf32>, vector<128x128xf32>, vector<1x128xf32> -> vector<1x128xf32>
    %29 = arith.addf %27, %28 : vector<1x128xf32>
    %30 = math.tanh %29 : vector<1x128xf32>
    %31 = vector.extract_strided_slice %9 {offsets = [3, 0], sizes = [1, 128], strides = [1, 1]} : vector<8x128xf32> to vector<1x128xf32>
    %cst_17 = arith.constant dense<0.000000e+00> : vector<1x128xf32>
    %32 = tpu.matmul %30, %17, %cst_17 {dimension_numbers = #tpu.dot_dimension_numbers<[1], [0], [0], [1], [0, 0, 1, 1], [], []>} : vector<1x128xf32>, vector<128x128xf32>, vector<1x128xf32> -> vector<1x128xf32>
    %33 = arith.addf %31, %32 : vector<1x128xf32>
    %34 = math.tanh %33 : vector<1x128xf32>
    %35 = vector.extract_strided_slice %9 {offsets = [4, 0], sizes = [1, 128], strides = [1, 1]} : vector<8x128xf32> to vector<1x128xf32>
    %cst_18 = arith.constant dense<0.000000e+00> : vector<1x128xf32>
    %36 = tpu.matmul %34, %17, %cst_18 {dimension_numbers = #tpu.dot_dimension_numbers<[1], [0], [0], [1], [0, 0, 1, 1], [], []>} : vector<1x128xf32>, vector<128x128xf32>, vector<1x128xf32> -> vector<1x128xf32>
    %37 = arith.addf %35, %36 : vector<1x128xf32>
    %38 = math.tanh %37 : vector<1x128xf32>
    %39 = vector.extract_strided_slice %9 {offsets = [5, 0], sizes = [1, 128], strides = [1, 1]} : vector<8x128xf32> to vector<1x128xf32>
    %cst_19 = arith.constant dense<0.000000e+00> : vector<1x128xf32>
    %40 = tpu.matmul %38, %17, %cst_19 {dimension_numbers = #tpu.dot_dimension_numbers<[1], [0], [0], [1], [0, 0, 1, 1], [], []>} : vector<1x128xf32>, vector<128x128xf32>, vector<1x128xf32> -> vector<1x128xf32>
    %41 = arith.addf %39, %40 : vector<1x128xf32>
    %42 = math.tanh %41 : vector<1x128xf32>
    %43 = vector.extract_strided_slice %9 {offsets = [6, 0], sizes = [1, 128], strides = [1, 1]} : vector<8x128xf32> to vector<1x128xf32>
    %cst_20 = arith.constant dense<0.000000e+00> : vector<1x128xf32>
    %44 = tpu.matmul %42, %17, %cst_20 {dimension_numbers = #tpu.dot_dimension_numbers<[1], [0], [0], [1], [0, 0, 1, 1], [], []>} : vector<1x128xf32>, vector<128x128xf32>, vector<1x128xf32> -> vector<1x128xf32>
    %45 = arith.addf %43, %44 : vector<1x128xf32>
    %46 = math.tanh %45 : vector<1x128xf32>
    %47 = vector.extract_strided_slice %9 {offsets = [7, 0], sizes = [1, 128], strides = [1, 1]} : vector<8x128xf32> to vector<1x128xf32>
    %cst_21 = arith.constant dense<0.000000e+00> : vector<1x128xf32>
    %48 = tpu.matmul %46, %17, %cst_21 {dimension_numbers = #tpu.dot_dimension_numbers<[1], [0], [0], [1], [0, 0, 1, 1], [], []>} : vector<1x128xf32>, vector<128x128xf32>, vector<1x128xf32> -> vector<1x128xf32>
    %49 = arith.addf %47, %48 : vector<1x128xf32>
    %50 = math.tanh %49 : vector<1x128xf32>
    %51 = tpu.concatenate %22, %26, %30, %34, %38, %42, %46, %50 in 0 : vector<1x128xf32>, vector<1x128xf32>, vector<1x128xf32>, vector<1x128xf32>, vector<1x128xf32>, vector<1x128xf32>, vector<1x128xf32>, vector<1x128xf32> -> vector<8x128xf32>
    %52 = tpu.concatenate %16, %51 in 1 : vector<8x128xf32>, vector<8x128xf32> -> vector<8x256xf32>
    %c0_22 = arith.constant 0 : index
    %c0_23 = arith.constant 0 : index
    %53 = vector.load %arg5[%c0_22, %c0_23] : memref<264x128xf32, #tpu.memory_space<vmem>>, vector<256x128xf32>
    %cst_24 = arith.constant dense<0.000000e+00> : vector<8x128xf32>
    %54 = tpu.matmul %52, %53, %cst_24 {dimension_numbers = #tpu.dot_dimension_numbers<[1], [0], [0], [1], [0, 0, 1, 1], [], []>} : vector<8x256xf32>, vector<256x128xf32>, vector<8x128xf32> -> vector<8x128xf32>
    %c256_25 = arith.constant 256 : index
    %c0_26 = arith.constant 0 : index
    %55 = vector.load %arg5[%c256_25, %c0_26] : memref<264x128xf32, #tpu.memory_space<vmem>>, vector<1x128xf32>
    %56 = vector.broadcast %55 : vector<1x128xf32> to vector<8x128xf32>
    %57 = arith.addf %54, %56 : vector<8x128xf32>
    %58 = math.tanh %57 : vector<8x128xf32>
    %cst_27 = arith.constant 2.000000e+00 : f32
    %59 = vector.broadcast %cst_27 : f32 to vector<8x128xf32>
    %60 = arith.mulf %59, %58 : vector<8x128xf32>
    %cst_28 = arith.constant 2.000000e+01 : f32
    %61 = vector.broadcast %cst_28 : f32 to vector<8x128xf32>
    %62 = arith.cmpf ogt, %57, %61 : vector<8x128xf32>
    %cst_29 = arith.constant 2.000000e+01 : f32
    %63 = vector.broadcast %cst_29 : f32 to vector<8x128xf32>
    %64 = arith.minimumf %57, %63 : vector<8x128xf32>
    %65 = math.exp %64 : vector<8x128xf32>
    %66 = math.log1p %65 : vector<8x128xf32>
    %67 = arith.select %62, %57, %66 : vector<8x128xi1>, vector<8x128xf32>
    %cst_30 = arith.constant 1.000000e-03 : f32
    %68 = vector.broadcast %cst_30 : f32 to vector<8x128xf32>
    %69 = arith.addf %67, %68 : vector<8x128xf32>
    %70 = tpu.iota {dimensions = array<i32: 1>} : vector<8x128xi32>
    %c0_i32 = arith.constant 0 : i32
    %71 = vector.broadcast %c0_i32 : i32 to vector<8x128xi32>
    %72 = arith.cmpi eq, %70, %71 : vector<8x128xi32>
    %c1_i32 = arith.constant 1 : i32
    %73 = vector.broadcast %c1_i32 : i32 to vector<8x128xi32>
    %74 = arith.cmpi eq, %70, %73 : vector<8x128xi32>
    %75 = arith.select %74, %69, %57 : vector<8x128xi1>, vector<8x128xf32>
    %76 = arith.select %72, %60, %75 : vector<8x128xi1>, vector<8x128xf32>
    %c0_31 = arith.constant 0 : index
    %c0_32 = arith.constant 0 : index
    %77 = vector.load %arg6[%c0_31, %c0_32] : memref<16x128xf32, #tpu.memory_space<vmem>>, vector<8x128xf32>
    tpu.vector_store %arg6[%c0_31, %c0_32], %76 {strides = array<i32>} : memref<16x128xf32, #tpu.memory_space<vmem>>, vector<8x128xf32>,
    %78 = vector.shape_cast %50 : vector<1x128xf32> to vector<1x128xf32>
    %79 = vector.broadcast %78 : vector<1x128xf32> to vector<8x128xf32>
    %c8 = arith.constant 8 : index
    %c0_33 = arith.constant 0 : index
    %80 = vector.load %arg6[%c8, %c0_33] : memref<16x128xf32, #tpu.memory_space<vmem>>, vector<8x128xf32>
    tpu.vector_store %arg6[%c8, %c0_33], %79 {strides = array<i32>} : memref<16x128xf32, #tpu.memory_space<vmem>>, vector<8x128xf32>,
    return
  }
}

</mosaic_0001>

<llo_original>
// kernel: _a3c_forward_impl.1
$region0: #{_a3c_forward_impl.1}
  #allocation0 [shape = 'u32[]', space=smem, size = 0x4, offset = 0x4, fixed_abs, tag = 'smem constant byte address 0x4 - core index']
  #allocation1 [shape = 'u32[144,128]{1,0:T(1,128)}', space=vmem, size = 0x12000, scoped, tag = 'internal scratch']
  %s0 = inlined_call_operand.vmem [shape: f32[8,3], index: 0, kind: input, shape index: {}]
  %s1 = inlined_call_operand.vmem [shape: f32[1,128], index: 1, kind: input, shape index: {}]
  %s2 = inlined_call_operand.vmem [shape: f32[4,384], index: 2, kind: input, shape index: {}]
  %s3 = inlined_call_operand.hbm [shape: f32[264,128], index: 3, kind: input, shape index: {}]
  %s4 = inlined_call_operand.hbm [shape: f32[128,128], index: 4, kind: input, shape index: {}]
  %s5 = inlined_call_operand.hbm [shape: f32[264,128], index: 5, kind: input, shape index: {}]
  %s6 = inlined_call_operand.vmem [shape: f32[16,128], index: 6, kind: output, shape index: {}]
  %s7 = sld [smem:[#allocation0]]
  $region46: #{_a3c_forward_impl.1} parent=0
    _
  %s9 = ssub.s32 1, %s7
  %s10 = scalar_select 0, %s9, %s7
  $region1: #{_a3c_forward_impl.1} parent=0
    #allocation2 [shape = 'u8[135168]{0}', space=vmem, size = 0x21000, scoped, tag = 'input window, operand 3, single buffered']
    #allocation3 [shape = 's32[1]{0}', space=sflag, size = 0x4, scoped, tag = 'scoped memory for _a3c_forward_impl.1']
    #allocation4 [shape = 'u8[65536]{0}', space=vmem, size = 0x10000, scoped, tag = 'input window, operand 4, single buffered']
    #allocation5 [shape = 's32[1]{0}', space=sflag, size = 0x4, scoped, tag = 'scoped memory for _a3c_forward_impl.1']
    #allocation6 [shape = 'u8[135168]{0}', space=vmem, size = 0x21000, scoped, tag = 'input window, operand 5, single buffered']
    %11 = vsyncpa [#allocation3], 0
    %12 = vsyncpa [#allocation5], 0
    // Predicated region
    $region2: #{_a3c_forward_impl.1} parent=1 // pred_check
      _
    $region3: #{_a3c_forward_impl.1} parent=1 // pred_check_branch
      %14 = sbr.rel (0) target = $region5
    $region4: #{_a3c_forward_impl.1} parent=1 // pred_region
      _
    $region5: #{_a3c_forward_impl.1} parent=1 // pred_fallthru
      _
    // Predicated region
    $region6: #{_a3c_forward_impl.1} parent=1 // pred_check
      _
    $region7: #{_a3c_forward_impl.1} parent=1 // pred_check_branch
      %16 = sbr.rel (0) target = $region9
    $region8: #{_a3c_forward_impl.1} parent=1 // pred_region
      _
    $region9: #{_a3c_forward_impl.1} parent=1 // pred_fallthru
      _
    // Predicated region
    $region10: #{_a3c_forward_impl.1} parent=1 // pred_check
      _
    $region11: #{_a3c_forward_impl.1} parent=1 // pred_check_branch
      %18 = sbr.rel (0) target = $region13
    $region12: #{_a3c_forward_impl.1} parent=1 // pred_region
      _
    $region13: #{_a3c_forward_impl.1} parent=1 // pred_fallthru
      _
    // Predicated region
    $region14: #{_a3c_forward_impl.1} parent=1 // pred_check
      _
    $region15: #{_a3c_forward_impl.1} parent=1 // pred_check_branch
      %20 = sbr.rel (0) target = $region17
    $region16: #{_a3c_forward_impl.1} parent=1 // pred_region
      %s22 = ssub.s32 4224, 4224
      %23 = vsyncadd [#allocation3], %s22
      %s24 = sshll.u32 [#allocation2], 4
      %s25 = int_to_ptr.vmem [resolvable:$true] %s24
      %30 = dma.hbm_to_vmem [thread:$0]  %s3, 4224, %s25, [#allocation3], 128, 128, 8
    $region17: #{_a3c_forward_impl.1} parent=1 // pred_fallthru
      _
    // Predicated region
    $region18: #{_a3c_forward_impl.1} parent=1 // pred_check
      _
    $region19: #{_a3c_forward_impl.1} parent=1 // pred_check_branch
      %32 = sbr.rel (0) target = $region21
    $region20: #{_a3c_forward_impl.1} parent=1 // pred_region
      %s34 = ssub.s32 2048, 2048
      %35 = vsyncadd [#allocation5], %s34
      %s36 = sshll.u32 [#allocation4], 4
      %s37 = int_to_ptr.vmem [resolvable:$true] %s36
      %42 = dma.hbm_to_vmem [thread:$0]  %s4, 2048, %s37, [#allocation5], 128, 128, 8
    $region21: #{_a3c_forward_impl.1} parent=1 // pred_fallthru
      _
    // Predicated region
    $region22: #{_a3c_forward_impl.1} parent=1 // pred_check
      _
    $region23: #{_a3c_forward_impl.1} parent=1 // pred_check_branch
      %44 = sbr.rel (0) target = $region25
    $region24: #{_a3c_forward_impl.1} parent=1 // pred_region
      %s46 = ssub.s32 4224, 4224
      %47 = vsyncadd [#allocation5], %s46
      %s48 = sshll.u32 [#allocation6], 4
      %s49 = int_to_ptr.vmem [resolvable:$true] %s48
      %54 = dma.hbm_to_vmem [thread:$0]  %s5, 4224, %s49, [#allocation5], 128, 128, 8
    $region25: #{_a3c_forward_impl.1} parent=1 // pred_fallthru
      _
    // Predicated region
    $region26: #{_a3c_forward_impl.1} parent=1 // pred_check
      _
    $region27: #{_a3c_forward_impl.1} parent=1 // pred_check_branch
      %56 = sbr.rel (0) target = $region29
    $region28: #{_a3c_forward_impl.1} parent=1 // pred_region
      %57 = dma.done [#allocation3], 4224
    $region29: #{_a3c_forward_impl.1} parent=1 // pred_fallthru
      _
    // Predicated region
    $region30: #{_a3c_forward_impl.1} parent=1 // pred_check
      _
    $region31: #{_a3c_forward_impl.1} parent=1 // pred_check_branch
      %59 = sbr.rel (0) target = $region33
    $region32: #{_a3c_forward_impl.1} parent=1 // pred_region
      %60 = dma.done [#allocation5], 2048
    $region33: #{_a3c_forward_impl.1} parent=1 // pred_fallthru
      _
    // Predicated region
    $region34: #{_a3c_forward_impl.1} parent=1 // pred_check
      _
    $region35: #{_a3c_forward_impl.1} parent=1 // pred_check_branch
      %62 = sbr.rel (0) target = $region37
    $region36: #{_a3c_forward_impl.1} parent=1 // pred_region
      %63 = dma.done [#allocation5], 4224
    $region37: #{_a3c_forward_impl.1} parent=1 // pred_fallthru
      _
    %v64 = vld [vmem:[%s0] sm:$0xff]
    %v65 = vld [vmem:[%s2] sm:$0x77]
    %v66 = vld [vmem:[%s2 + $0x8] sm:$0x7]
    %s67 = scalar_lea.vmem %s2, 3
    %v68 = vld [vmem:[%s67] ss:$4 sm:$0x7]
    %v70 = vlaneseq
    %v71 = vshrl.u32 %v70, 7
    %v72 = vsub.s32 0, %v71
    %v73 = vrot.slane %v68, %v72
    %v74 = vlaneseq
    %v75 = vshrl.u32 %v74, 7
    %v76 = vsub.s32 1, %v75
    %v77 = vrot.slane %v68, %v76
    %v78 = vlaneseq
    %v79 = vshrl.u32 %v78, 7
    %v80 = vsub.s32 2, %v79
    %v81 = vrot.slane %v68, %v80
    %v87 = vcombine.high %v65, %v65
    %vm88 = vcmask 23552
    %v90 = vsel %vm88, %v64, 0
    %vm92 = vcmask 1042432
    %v93 = vsel %vm92, %v65, 0
    %v95 = vsel %vm92, %v87, 0
    %v97 = vsel %vm92, %v66, 0
    %99 = vmatprep.subr.mxu0 %v95
    %100 = vmatpush1.msra.mxu0 %v93
    %101 = vmatprep.subr.mxu0 0.0
    %102 = vmatpush1.msra.mxu0 0.0
    %103 = vmatprep.subr.mxu0 0.0
    %104 = vmatpush1.msra.mxu0 0.0
    %105 = vmatprep.subr.mxu0 0.0
    %106 = vmatpush1.msra.mxu0 0.0
    %107 = vmatprep.subr.mxu0 0.0
    %108 = vmatpush1.msra.mxu0 0.0
    %109 = vmatprep.subr.mxu0 0.0
    %110 = vmatpush1.msra.mxu0 0.0
    %111 = vmatprep.subr.mxu0 0.0
    %112 = vmatpush1.msra.mxu0 0.0
    %113 = vmatprep.subr.mxu0 0.0
    %114 = vmatpush1.msra.mxu0 0.0
    %115 = vmatprep.subr.mxu0 0.0
    %116 = vmatpush1.msra.mxu0 0.0
    %117 = vmatprep.subr.mxu0 0.0
    %118 = vmatpush1.msra.mxu0 0.0
    %119 = vmatprep.subr.mxu0 0.0
    %120 = vmatpush1.msra.mxu0 0.0
    %121 = vmatprep.subr.mxu0 0.0
    %122 = vmatpush1.msra.mxu0 0.0
    %123 = vmatprep.subr.mxu0 0.0
    %124 = vmatpush1.msra.mxu0 0.0
    %125 = vmatprep.subr.mxu0 0.0
    %126 = vmatpush1.msra.mxu0 0.0
    %127 = vmatprep.subr.mxu0 0.0
    %128 = vmatpush1.msra.mxu0 0.0
    %129 = vmatprep.subr.mxu0 0.0
    %130 = vmatpush1.msra.mxu0 0.0
    %131 = vmatprep.subr.mxu0 0.0
    %132 = vmatpush1.msra.mxu0 0.0
    %133 = vmatprep.subr.mxu0 0.0
    %134 = vmatpush1.msra.mxu0 0.0
    %135 = vmatprep.subr.mxu0 0.0
    %136 = vmatpush1.msra.mxu0 0.0
    %137 = vmatprep.subr.mxu0 0.0
    %138 = vmatpush1.msra.mxu0 0.0
    %139 = vmatprep.subr.mxu0 0.0
    %140 = vmatpush1.msra.mxu0 0.0
    %141 = vmatprep.subr.mxu0 0.0
    %142 = vmatpush1.msra.mxu0 0.0
    %143 = vmatprep.subr.mxu0 0.0
    %144 = vmatpush1.msra.mxu0 0.0
    %145 = vmatprep.subr.mxu0 0.0
    %146 = vmatpush1.msra.mxu0 0.0
    %147 = vmatprep.subr.mxu0 0.0
    %148 = vmatpush1.msra.mxu0 0.0
    %149 = vmatprep.subr.mxu0 0.0
    %150 = vmatpush1.msra.mxu0 0.0
    %151 = vmatprep.subr.mxu0 0.0
    %152 = vmatpush1.msra.mxu0 0.0
    %153 = vmatprep.subr.mxu0 0.0
    %154 = vmatpush1.msra.mxu0 0.0
    %155 = vmatprep.subr.mxu0 0.0
    %156 = vmatpush1.msra.mxu0 0.0
    %157 = vmatprep.subr.mxu0 0.0
    %158 = vmatpush1.msra.mxu0 0.0
    %159 = vmatprep.subr.mxu0 0.0
    %160 = vmatpush1.msra.mxu0 0.0
    %161 = vmatprep.subr.mxu0 0.0
    %162 = vmatpush1.msra.mxu0 0.0
    %163 = vmatprep.mubr.f32.mxu0 0.0
    %164 = vmatmul.mubr.f32.gmra.mrb[0].mxu0 %v90
    %v165 = vpop.f32.mrb[0].mxu0
    %v166 = vadd.f32 %v73, %v165
    %v167 = vpop.f32.mrb[0].mxu0
    %v168 = vadd.f32 %v77, %v167
    %169 = vdwg.mxu0
    %170 = vmatprep.subr.mxu0 0.0
    %171 = vmatpush1.msra.mxu0 %v97
    %172 = vmatprep.subr.mxu0 0.0
    %173 = vmatpush1.msra.mxu0 0.0
    %174 = vmatprep.subr.mxu0 0.0
    %175 = vmatpush1.msra.mxu0 0.0
    %176 = vmatprep.subr.mxu0 0.0
    %177 = vmatpush1.msra.mxu0 0.0
    %178 = vmatprep.subr.mxu0 0.0
    %179 = vmatpush1.msra.mxu0 0.0
    %180 = vmatprep.subr.mxu0 0.0
    %181 = vmatpush1.msra.mxu0 0.0
    %182 = vmatprep.subr.mxu0 0.0
    %183 = vmatpush1.msra.mxu0 0.0
    %184 = vmatprep.subr.mxu0 0.0
    %185 = vmatpush1.msra.mxu0 0.0
    %186 = vmatprep.subr.mxu0 0.0
    %187 = vmatpush1.msra.mxu0 0.0
    %188 = vmatprep.subr.mxu0 0.0
    %189 = vmatpush1.msra.mxu0 0.0
    %190 = vmatprep.subr.mxu0 0.0
    %191 = vmatpush1.msra.mxu0 0.0
    %192 = vmatprep.subr.mxu0 0.0
    %193 = vmatpush1.msra.mxu0 0.0
    %194 = vmatprep.subr.mxu0 0.0
    %195 = vmatpush1.msra.mxu0 0.0
    %196 = vmatprep.subr.mxu0 0.0
    %197 = vmatpush1.msra.mxu0 0.0
    %198 = vmatprep.subr.mxu0 0.0
    %199 = vmatpush1.msra.mxu0 0.0
    %200 = vmatprep.subr.mxu0 0.0
    %201 = vmatpush1.msra.mxu0 0.0
    %202 = vmatprep.subr.mxu0 0.0
    %203 = vmatpush1.msra.mxu0 0.0
    %204 = vmatprep.subr.mxu0 0.0
    %205 = vmatpush1.msra.mxu0 0.0
    %206 = vmatprep.subr.mxu0 0.0
    %207 = vmatpush1.msra.mxu0 0.0
    %208 = vmatprep.subr.mxu0 0.0
    %209 = vmatpush1.msra.mxu0 0.0
    %210 = vmatprep.subr.mxu0 0.0
    %211 = vmatpush1.msra.mxu0 0.0
    %212 = vmatprep.subr.mxu0 0.0
    %213 = vmatpush1.msra.mxu0 0.0
    %214 = vmatprep.subr.mxu0 0.0
    %215 = vmatpush1.msra.mxu0 0.0
    %216 = vmatprep.subr.mxu0 0.0
    %217 = vmatpush1.msra.mxu0 0.0
    %218 = vmatprep.subr.mxu0 0.0
    %219 = vmatpush1.msra.mxu0 0.0
    %220 = vmatprep.subr.mxu0 0.0
    %221 = vmatpush1.msra.mxu0 0.0
    %222 = vmatprep.subr.mxu0 0.0
    %223 = vmatpush1.msra.mxu0 0.0
    %224 = vmatprep.subr.mxu0 0.0
    %225 = vmatpush1.msra.mxu0 0.0
    %226 = vmatprep.subr.mxu0 0.0
    %227 = vmatpush1.msra.mxu0 0.0
    %228 = vmatprep.subr.mxu0 0.0
    %229 = vmatpush1.msra.mxu0 0.0
    %230 = vmatprep.subr.mxu0 0.0
    %231 = vmatpush1.msra.mxu0 0.0
    %232 = vmatprep.subr.mxu0 0.0
    %233 = vmatpush1.msra.mxu0 0.0
    %234 = vmatprep.mubr.f32.mxu0 0.0
    %235 = vmatmul.mubr.f32.gmra.mrb[0].mxu0 %v90
    %v236 = vpop.f32.mrb[0].mxu0
    %v237 = vadd.f32 %v81, %v236
    %v238 = vpop.f32.mrb[0].mxu0
    %239 = vdwg.mxu0
    %v240 = vmax.f32 %v166, 0.0
    %v241 = vmax.f32 %v168, 0.0
    %v242 = vld [vmem:[#allocation2] sm:$0xff]
    %v243 = vld [vmem:[#allocation2 + $0x8] sm:$0xff]
    %v244 = vld [vmem:[#allocation2 + $0x10] sm:$0xff]
    %v245 = vld [vmem:[#allocation2 + $0x18] sm:$0xff]
    %v246 = vld [vmem:[#allocation2 + $0x20] sm:$0xff]
    %v247 = vld [vmem:[#allocation2 + $0x28] sm:$0xff]
    %v248 = vld [vmem:[#allocation2 + $0x30] sm:$0xff]
    %v249 = vld [vmem:[#allocation2 + $0x38] sm:$0xff]
    %v250 = vld [vmem:[#allocation2 + $0x40] sm:$0xff]
    %v251 = vld [vmem:[#allocation2 + $0x48] sm:$0xff]
    %v252 = vld [vmem:[#allocation2 + $0x50] sm:$0xff]
    %v253 = vld [vmem:[#allocation2 + $0x58] sm:$0xff]
    %v254 = vld [vmem:[#allocation2 + $0x60] sm:$0xff]
    %v255 = vld [vmem:[#allocation2 + $0x68] sm:$0xff]
    %v256 = vld [vmem:[#allocation2 + $0x70] sm:$0xff]
    %v257 = vld [vmem:[#allocation2 + $0x78] sm:$0xff]
    %v258 = vld [vmem:[#allocation2 + $0x80] sm:$0xff]
    %v259 = vld [vmem:[#allocation2 + $0x88] sm:$0xff]
    %v260 = vld [vmem:[#allocation2 + $0x90] sm:$0xff]
    %v261 = vld [vmem:[#allocation2 + $0x98] sm:$0xff]
    %v262 = vld [vmem:[#allocation2 + $0xa0] sm:$0xff]
    %v263 = vld [vmem:[#allocation2 + $0xa8] sm:$0xff]
    %v264 = vld [vmem:[#allocation2 + $0xb0] sm:$0xff]
    %v265 = vld [vmem:[#allocation2 + $0xb8] sm:$0xff]
    %v266 = vld [vmem:[#allocation2 + $0xc0] sm:$0xff]
    %v267 = vld [vmem:[#allocation2 + $0xc8] sm:$0xff]
    %v268 = vld [vmem:[#allocation2 + $0xd0] sm:$0xff]
    %v269 = vld [vmem:[#allocation2 + $0xd8] sm:$0xff]
    %v270 = vld [vmem:[#allocation2 + $0xe0] sm:$0xff]
    %v271 = vld [vmem:[#allocation2 + $0xe8] sm:$0xff]
    %v272 = vld [vmem:[#allocation2 + $0xf0] sm:$0xff]
    %v273 = vld [vmem:[#allocation2 + $0xf8] sm:$0xff]
    %v274 = vld [vmem:[#allocation2 + $0x100] sm:$0x1]
    %v275 = vlaneseq
    %v276 = vshrl.u32 %v275, 7
    %v277 = vsub.s32 0, %v276
    %v278 = vrot.slane %v274, %v277
    %279 = vmatprep.subr.mxu0 0.0
    %280 = vmatpush1.msra.mxu0 %v242
    %281 = vmatprep.subr.mxu0 0.0
    %282 = vmatpush1.msra.mxu0 %v243
    %283 = vmatprep.subr.mxu0 0.0
    %284 = vmatpush1.msra.mxu0 %v244
    %285 = vmatprep.subr.mxu0 0.0
    %286 = vmatpush1.msra.mxu0 %v245
    %287 = vmatprep.subr.mxu0 0.0
    %288 = vmatpush1.msra.mxu0 %v246
    %289 = vmatprep.subr.mxu0 0.0
    %290 = vmatpush1.msra.mxu0 %v247
    %291 = vmatprep.subr.mxu0 0.0
    %292 = vmatpush1.msra.mxu0 %v248
    %293 = vmatprep.subr.mxu0 0.0
    %294 = vmatpush1.msra.mxu0 %v249
    %295 = vmatprep.subr.mxu0 0.0
    %296 = vmatpush1.msra.mxu0 %v250
    %297 = vmatprep.subr.mxu0 0.0
    %298 = vmatpush1.msra.mxu0 %v251
    %299 = vmatprep.subr.mxu0 0.0
    %300 = vmatpush1.msra.mxu0 %v252
    %301 = vmatprep.subr.mxu0 0.0
    %302 = vmatpush1.msra.mxu0 %v253
    %303 = vmatprep.subr.mxu0 0.0
    %304 = vmatpush1.msra.mxu0 %v254
    %305 = vmatprep.subr.mxu0 0.0
    %306 = vmatpush1.msra.mxu0 %v255
    %307 = vmatprep.subr.mxu0 0.0
    %308 = vmatpush1.msra.mxu0 %v256
    %309 = vmatprep.subr.mxu0 0.0
    %310 = vmatpush1.msra.mxu0 %v257
    %311 = vmatprep.subr.mxu0 0.0
    %312 = vmatpush1.msra.mxu0 %v258
    %313 = vmatprep.subr.mxu0 0.0
    %314 = vmatpush1.msra.mxu0 %v259
    %315 = vmatprep.subr.mxu0 0.0
    %316 = vmatpush1.msra.mxu0 %v260
    %317 = vmatprep.subr.mxu0 0.0
    %318 = vmatpush1.msra.mxu0 %v261
    %319 = vmatprep.subr.mxu0 0.0
    %320 = vmatpush1.msra.mxu0 %v262
    %321 = vmatprep.subr.mxu0 0.0
    %322 = vmatpush1.msra.mxu0 %v263
    %323 = vmatprep.subr.mxu0 0.0
    %324 = vmatpush1.msra.mxu0 %v264
    %325 = vmatprep.subr.mxu0 0.0
    %326 = vmatpush1.msra.mxu0 %v265
    %327 = vmatprep.subr.mxu0 0.0
    %328 = vmatpush1.msra.mxu0 %v266
    %329 = vmatprep.subr.mxu0 0.0
    %330 = vmatpush1.msra.mxu0 %v267
    %331 = vmatprep.subr.mxu0 0.0
    %332 = vmatpush1.msra.mxu0 %v268
    %333 = vmatprep.subr.mxu0 0.0
    %334 = vmatpush1.msra.mxu0 %v269
    %335 = vmatprep.subr.mxu0 0.0
    %336 = vmatpush1.msra.mxu0 %v270
    %337 = vmatprep.subr.mxu0 0.0
    %338 = vmatpush1.msra.mxu0 %v271
    %339 = vmatprep.subr.mxu0 0.0
    %340 = vmatpush1.msra.mxu0 %v272
    %341 = vmatprep.subr.mxu0 0.0
    %342 = vmatpush1.msra.mxu0 %v273
    %343 = vmatprep.mubr.f32.mxu0 %v241
    %344 = vmatmul.mubr.f32.gmra.mrb[0].mxu0 %v240
    %v345 = vpop.f32.mrb[0].mxu0
    %v346 = vadd.f32 %v278, %v345
    %v347 = vpop.f32.mrb[0].mxu0
    %348 = vdwg.mxu0
    %v349 = vmax.f32 %v346, 0.0
    %v350 = vld [vmem:[#allocation4] sm:$0xff]
    %v351 = vld [vmem:[#allocation4 + $0x8] sm:$0xff]
    %v352 = vld [vmem:[#allocation4 + $0x10] sm:$0xff]
    %v353 = vld [vmem:[#allocation4 + $0x18] sm:$0xff]
    %v354 = vld [vmem:[#allocation4 + $0x20] sm:$0xff]
    %v355 = vld [vmem:[#allocation4 + $0x28] sm:$0xff]
    %v356 = vld [vmem:[#allocation4 + $0x30] sm:$0xff]
    %v357 = vld [vmem:[#allocation4 + $0x38] sm:$0xff]
    %v358 = vld [vmem:[#allocation4 + $0x40] sm:$0xff]
    %v359 = vld [vmem:[#allocation4 + $0x48] sm:$0xff]
    %v360 = vld [vmem:[#allocation4 + $0x50] sm:$0xff]
    %v361 = vld [vmem:[#allocation4 + $0x58] sm:$0xff]
    %v362 = vld [vmem:[#allocation4 + $0x60] sm:$0xff]
    %v363 = vld [vmem:[#allocation4 + $0x68] sm:$0xff]
    %v364 = vld [vmem:[#allocation4 + $0x70] sm:$0xff]
    %v365 = vld [vmem:[#allocation4 + $0x78] sm:$0xff]
    %v366 = vld [vmem:[%s1] sm:$0x1]
    %367 = vmatprep.subr.mxu0 0.0
    %368 = vmatpush1.msra.mxu0 %v350
    %369 = vmatprep.subr.mxu0 0.0
    %370 = vmatpush1.msra.mxu0 %v351
    %371 = vmatprep.subr.mxu0 0.0
    %372 = vmatpush1.msra.mxu0 %v352
    %373 = vmatprep.subr.mxu0 0.0
    %374 = vmatpush1.msra.mxu0 %v353
    %375 = vmatprep.subr.mxu0 0.0
    %376 = vmatpush1.msra.mxu0 %v354
    %377 = vmatprep.subr.mxu0 0.0
    %378 = vmatpush1.msra.mxu0 %v355
    %379 = vmatprep.subr.mxu0 0.0
    %380 = vmatpush1.msra.mxu0 %v356
    %381 = vmatprep.subr.mxu0 0.0
    %382 = vmatpush1.msra.mxu0 %v357
    %383 = vmatprep.subr.mxu0 0.0
    %384 = vmatpush1.msra.mxu0 %v358
    %385 = vmatprep.subr.mxu0 0.0
    %386 = vmatpush1.msra.mxu0 %v359
    %387 = vmatprep.subr.mxu0 0.0
    %388 = vmatpush1.msra.mxu0 %v360
    %389 = vmatprep.subr.mxu0 0.0
    %390 = vmatpush1.msra.mxu0 %v361
    %391 = vmatprep.subr.mxu0 0.0
    %392 = vmatpush1.msra.mxu0 %v362
    %393 = vmatprep.subr.mxu0 0.0
    %394 = vmatpush1.msra.mxu0 %v363
    %395 = vmatprep.subr.mxu0 0.0
    %396 = vmatpush1.msra.mxu0 %v364
    %397 = vmatprep.subr.mxu0 0.0
    %398 = vmatpush1.msra.mxu0 %v365
    %399 = vmatprep.subr.mxu0 0.0
    %400 = vmatpush1.msra.mxu0 0.0
    %401 = vmatprep.subr.mxu0 0.0
    %402 = vmatpush1.msra.mxu0 0.0
    %403 = vmatprep.subr.mxu0 0.0
    %404 = vmatpush1.msra.mxu0 0.0
    %405 = vmatprep.subr.mxu0 0.0
    %406 = vmatpush1.msra.mxu0 0.0
    %407 = vmatprep.subr.mxu0 0.0
    %408 = vmatpush1.msra.mxu0 0.0
    %409 = vmatprep.subr.mxu0 0.0
    %410 = vmatpush1.msra.mxu0 0.0
    %411 = vmatprep.subr.mxu0 0.0
    %412 = vmatpush1.msra.mxu0 0.0
    %413 = vmatprep.subr.mxu0 0.0
    %414 = vmatpush1.msra.mxu0 0.0
    %415 = vmatprep.subr.mxu0 0.0
    %416 = vmatpush1.msra.mxu0 0.0
    %417 = vmatprep.subr.mxu0 0.0
    %418 = vmatpush1.msra.mxu0 0.0
    %419 = vmatprep.subr.mxu0 0.0
    %420 = vmatpush1.msra.mxu0 0.0
    %421 = vmatprep.subr.mxu0 0.0
    %422 = vmatpush1.msra.mxu0 0.0
    %423 = vmatprep.subr.mxu0 0.0
    %424 = vmatpush1.msra.mxu0 0.0
    %425 = vmatprep.subr.mxu0 0.0
    %426 = vmatpush1.msra.mxu0 0.0
    %427 = vmatprep.subr.mxu0 0.0
    %428 = vmatpush1.msra.mxu0 0.0
    %429 = vmatprep.subr.mxu0 0.0
    %430 = vmatpush1.msra.mxu0 0.0
    %431 = vmatprep.mubr.f32.mxu0 0.0
    %432 = vmatmul.mubr.f32.gmra.mrb[0].mxu0 %v366
    %v433 = vpop.f32.mrb[0].mxu0
    %v434 = vadd.f32 0.0, %v433
    %v435 = vpop.f32.mrb[0].mxu0
    %436 = vdwg.mxu0
    %v437 = vadd.f32 %v237, %v434
    %v438 = vtanh.pop %v437
    %439 = vmatprep.subr.mxu0 0.0
    %440 = vmatpush1.msra.mxu0 %v350
    %441 = vmatprep.subr.mxu0 0.0
    %442 = vmatpush1.msra.mxu0 %v351
    %443 = vmatprep.subr.mxu0 0.0
    %444 = vmatpush1.msra.mxu0 %v352
    %445 = vmatprep.subr.mxu0 0.0
    %446 = vmatpush1.msra.mxu0 %v353
    %447 = vmatprep.subr.mxu0 0.0
    %448 = vmatpush1.msra.mxu0 %v354
    %449 = vmatprep.subr.mxu0 0.0
    %450 = vmatpush1.msra.mxu0 %v355
    %451 = vmatprep.subr.mxu0 0.0
    %452 = vmatpush1.msra.mxu0 %v356
    %453 = vmatprep.subr.mxu0 0.0
    %454 = vmatpush1.msra.mxu0 %v357
    %455 = vmatprep.subr.mxu0 0.0
    %456 = vmatpush1.msra.mxu0 %v358
    %457 = vmatprep.subr.mxu0 0.0
    %458 = vmatpush1.msra.mxu0 %v359
    %459 = vmatprep.subr.mxu0 0.0
    %460 = vmatpush1.msra.mxu0 %v360
    %461 = vmatprep.subr.mxu0 0.0
    %462 = vmatpush1.msra.mxu0 %v361
    %463 = vmatprep.subr.mxu0 0.0
    %464 = vmatpush1.msra.mxu0 %v362
    %465 = vmatprep.subr.mxu0 0.0
    %466 = vmatpush1.msra.mxu0 %v363
    %467 = vmatprep.subr.mxu0 0.0
    %468 = vmatpush1.msra.mxu0 %v364
    %469 = vmatprep.subr.mxu0 0.0
    %470 = vmatpush1.msra.mxu0 %v365
    %471 = vmatprep.subr.mxu0 0.0
    %472 = vmatpush1.msra.mxu0 0.0
    %473 = vmatprep.subr.mxu0 0.0
    %474 = vmatpush1.msra.mxu0 0.0
    %475 = vmatprep.subr.mxu0 0.0
    %476 = vmatpush1.msra.mxu0 0.0
    %477 = vmatprep.subr.mxu0 0.0
    %478 = vmatpush1.msra.mxu0 0.0
    %479 = vmatprep.subr.mxu0 0.0
    %480 = vmatpush1.msra.mxu0 0.0
    %481 = vmatprep.subr.mxu0 0.0
    %482 = vmatpush1.msra.mxu0 0.0
    %483 = vmatprep.subr.mxu0 0.0
    %484 = vmatpush1.msra.mxu0 0.0
    %485 = vmatprep.subr.mxu0 0.0
    %486 = vmatpush1.msra.mxu0 0.0
    %487 = vmatprep.subr.mxu0 0.0
    %488 = vmatpush1.msra.mxu0 0.0
    %489 = vmatprep.subr.mxu0 0.0
    %490 = vmatpush1.msra.mxu0 0.0
    %491 = vmatprep.subr.mxu0 0.0
    %492 = vmatpush1.msra.mxu0 0.0
    %493 = vmatprep.subr.mxu0 0.0
    %494 = vmatpush1.msra.mxu0 0.0
    %495 = vmatprep.subr.mxu0 0.0
    %496 = vmatpush1.msra.mxu0 0.0
    %497 = vmatprep.subr.mxu0 0.0
    %498 = vmatpush1.msra.mxu0 0.0
    %499 = vmatprep.subr.mxu0 0.0
    %500 = vmatpush1.msra.mxu0 0.0
    %501 = vmatprep.subr.mxu0 0.0
    %502 = vmatpush1.msra.mxu0 0.0
    %503 = vmatprep.mubr.f32.mxu0 0.0
    %504 = vmatmul.mubr.f32.gmra.mrb[0].mxu0 %v438
    %v505 = vpop.f32.mrb[0].mxu0
    %v506 = vadd.f32 0.0, %v505
    %v507 = vpop.f32.mrb[0].mxu0
    %508 = vdwg.mxu0
    %v510 = vrot.slane %v506, 7
    %v512 = vadd.f32 %v237, %v510
    %v513 = vtanh.pop %v512
    %v515 = vrot.slane %v513, 1
    %517 = vmatprep.subr.mxu0 0.0
    %518 = vmatpush1.msra.mxu0 %v350
    %519 = vmatprep.subr.mxu0 0.0
    %520 = vmatpush1.msra.mxu0 %v351
    %521 = vmatprep.subr.mxu0 0.0
    %522 = vmatpush1.msra.mxu0 %v352
    %523 = vmatprep.subr.mxu0 0.0
    %524 = vmatpush1.msra.mxu0 %v353
    %525 = vmatprep.subr.mxu0 0.0
    %526 = vmatpush1.msra.mxu0 %v354
    %527 = vmatprep.subr.mxu0 0.0
    %528 = vmatpush1.msra.mxu0 %v355
    %529 = vmatprep.subr.mxu0 0.0
    %530 = vmatpush1.msra.mxu0 %v356
    %531 = vmatprep.subr.mxu0 0.0
    %532 = vmatpush1.msra.mxu0 %v357
    %533 = vmatprep.subr.mxu0 0.0
    %534 = vmatpush1.msra.mxu0 %v358
    %535 = vmatprep.subr.mxu0 0.0
    %536 = vmatpush1.msra.mxu0 %v359
    %537 = vmatprep.subr.mxu0 0.0
    %538 = vmatpush1.msra.mxu0 %v360
    %539 = vmatprep.subr.mxu0 0.0
    %540 = vmatpush1.msra.mxu0 %v361
    %541 = vmatprep.subr.mxu0 0.0
    %542 = vmatpush1.msra.mxu0 %v362
    %543 = vmatprep.subr.mxu0 0.0
    %544 = vmatpush1.msra.mxu0 %v363
    %545 = vmatprep.subr.mxu0 0.0
    %546 = vmatpush1.msra.mxu0 %v364
    %547 = vmatprep.subr.mxu0 0.0
    %548 = vmatpush1.msra.mxu0 %v365
    %549 = vmatprep.subr.mxu0 0.0
    %550 = vmatpush1.msra.mxu0 0.0
    %551 = vmatprep.subr.mxu0 0.0
    %552 = vmatpush1.msra.mxu0 0.0
    %553 = vmatprep.subr.mxu0 0.0
    %554 = vmatpush1.msra.mxu0 0.0
    %555 = vmatprep.subr.mxu0 0.0
    %556 = vmatpush1.msra.mxu0 0.0
    %557 = vmatprep.subr.mxu0 0.0
    %558 = vmatpush1.msra.mxu0 0.0
    %559 = vmatprep.subr.mxu0 0.0
    %560 = vmatpush1.msra.mxu0 0.0
    %561 = vmatprep.subr.mxu0 0.0
    %562 = vmatpush1.msra.mxu0 0.0
    %563 = vmatprep.subr.mxu0 0.0
    %564 = vmatpush1.msra.mxu0 0.0
    %565 = vmatprep.subr.mxu0 0.0
    %566 = vmatpush1.msra.mxu0 0.0
    %567 = vmatprep.subr.mxu0 0.0
    %568 = vmatpush1.msra.mxu0 0.0
    %569 = vmatprep.subr.mxu0 0.0
    %570 = vmatpush1.msra.mxu0 0.0
    %571 = vmatprep.subr.mxu0 0.0
    %572 = vmatpush1.msra.mxu0 0.0
    %573 = vmatprep.subr.mxu0 0.0
    %574 = vmatpush1.msra.mxu0 0.0
    %575 = vmatprep.subr.mxu0 0.0
    %576 = vmatpush1.msra.mxu0 0.0
    %577 = vmatprep.subr.mxu0 0.0
    %578 = vmatpush1.msra.mxu0 0.0
    %579 = vmatprep.subr.mxu0 0.0
    %580 = vmatpush1.msra.mxu0 0.0
    %581 = vmatprep.mubr.f32.mxu0 0.0
    %582 = vmatmul.mubr.f32.gmra.mrb[0].mxu0 %v515
    %v583 = vpop.f32.mrb[0].mxu0
    %v584 = vadd.f32 0.0, %v583
    %v585 = vpop.f32.mrb[0].mxu0
    %586 = vdwg.mxu0
    %v588 = vrot.slane %v584, 6
    %v590 = vadd.f32 %v237, %v588
    %v591 = vtanh.pop %v590
    %v593 = vrot.slane %v591, 2
    %595 = vmatprep.subr.mxu0 0.0
    %596 = vmatpush1.msra.mxu0 %v350
    %597 = vmatprep.subr.mxu0 0.0
    %598 = vmatpush1.msra.mxu0 %v351
    %599 = vmatprep.subr.mxu0 0.0
    %600 = vmatpush1.msra.mxu0 %v352
    %601 = vmatprep.subr.mxu0 0.0
    %602 = vmatpush1.msra.mxu0 %v353
    %603 = vmatprep.subr.mxu0 0.0
    %604 = vmatpush1.msra.mxu0 %v354
    %605 = vmatprep.subr.mxu0 0.0
    %606 = vmatpush1.msra.mxu0 %v355
    %607 = vmatprep.subr.mxu0 0.0
    %608 = vmatpush1.msra.mxu0 %v356
    %609 = vmatprep.subr.mxu0 0.0
    %610 = vmatpush1.msra.mxu0 %v357
    %611 = vmatprep.subr.mxu0 0.0
    %612 = vmatpush1.msra.mxu0 %v358
    %613 = vmatprep.subr.mxu0 0.0
    %614 = vmatpush1.msra.mxu0 %v359
    %615 = vmatprep.subr.mxu0 0.0
    %616 = vmatpush1.msra.mxu0 %v360
    %617 = vmatprep.subr.mxu0 0.0
    %618 = vmatpush1.msra.mxu0 %v361
    %619 = vmatprep.subr.mxu0 0.0
    %620 = vmatpush1.msra.mxu0 %v362
    %621 = vmatprep.subr.mxu0 0.0
    %622 = vmatpush1.msra.mxu0 %v363
    %623 = vmatprep.subr.mxu0 0.0
    %624 = vmatpush1.msra.mxu0 %v364
    %625 = vmatprep.subr.mxu0 0.0
    %626 = vmatpush1.msra.mxu0 %v365
    %627 = vmatprep.subr.mxu0 0.0
    %628 = vmatpush1.msra.mxu0 0.0
    %629 = vmatprep.subr.mxu0 0.0
    %630 = vmatpush1.msra.mxu0 0.0
    %631 = vmatprep.subr.mxu0 0.0
    %632 = vmatpush1.msra.mxu0 0.0
    %633 = vmatprep.subr.mxu0 0.0
    %634 = vmatpush1.msra.mxu0 0.0
    %635 = vmatprep.subr.mxu0 0.0
    %636 = vmatpush1.msra.mxu0 0.0
    %637 = vmatprep.subr.mxu0 0.0
    %638 = vmatpush1.msra.mxu0 0.0
    %639 = vmatprep.subr.mxu0 0.0
    %640 = vmatpush1.msra.mxu0 0.0
    %641 = vmatprep.subr.mxu0 0.0
    %642 = vmatpush1.msra.mxu0 0.0
    %643 = vmatprep.subr.mxu0 0.0
    %644 = vmatpush1.msra.mxu0 0.0
    %645 = vmatprep.subr.mxu0 0.0
    %646 = vmatpush1.msra.mxu0 0.0
    %647 = vmatprep.subr.mxu0 0.0
    %648 = vmatpush1.msra.mxu0 0.0
    %649 = vmatprep.subr.mxu0 0.0
    %650 = vmatpush1.msra.mxu0 0.0
    %651 = vmatprep.subr.mxu0 0.0
    %652 = vmatpush1.msra.mxu0 0.0
    %653 = vmatprep.subr.mxu0 0.0
    %654 = vmatpush1.msra.mxu0 0.0
    %655 = vmatprep.subr.mxu0 0.0
    %656 = vmatpush1.msra.mxu0 0.0
    %657 = vmatprep.subr.mxu0 0.0
    %658 = vmatpush1.msra.mxu0 0.0
    %659 = vmatprep.mubr.f32.mxu0 0.0
    %660 = vmatmul.mubr.f32.gmra.mrb[0].mxu0 %v593
    %v661 = vpop.f32.mrb[0].mxu0
    %v662 = vadd.f32 0.0, %v661
    %v663 = vpop.f32.mrb[0].mxu0
    %664 = vdwg.mxu0
    %v666 = vrot.slane %v662, 5
    %v668 = vadd.f32 %v237, %v666
    %v669 = vtanh.pop %v668
    %v671 = vrot.slane %v669, 3
    %673 = vmatprep.subr.mxu0 0.0
    %674 = vmatpush1.msra.mxu0 %v350
    %675 = vmatprep.subr.mxu0 0.0
    %676 = vmatpush1.msra.mxu0 %v351
    %677 = vmatprep.subr.mxu0 0.0
    %678 = vmatpush1.msra.mxu0 %v352
    %679 = vmatprep.subr.mxu0 0.0
    %680 = vmatpush1.msra.mxu0 %v353
    %681 = vmatprep.subr.mxu0 0.0
    %682 = vmatpush1.msra.mxu0 %v354
    %683 = vmatprep.subr.mxu0 0.0
    %684 = vmatpush1.msra.mxu0 %v355
    %685 = vmatprep.subr.mxu0 0.0
    %686 = vmatpush1.msra.mxu0 %v356
    %687 = vmatprep.subr.mxu0 0.0
    %688 = vmatpush1.msra.mxu0 %v357
    %689 = vmatprep.subr.mxu0 0.0
    %690 = vmatpush1.msra.mxu0 %v358
    %691 = vmatprep.subr.mxu0 0.0
    %692 = vmatpush1.msra.mxu0 %v359
    %693 = vmatprep.subr.mxu0 0.0
    %694 = vmatpush1.msra.mxu0 %v360
    %695 = vmatprep.subr.mxu0 0.0
    %696 = vmatpush1.msra.mxu0 %v361
    %697 = vmatprep.subr.mxu0 0.0
    %698 = vmatpush1.msra.mxu0 %v362
    %699 = vmatprep.subr.mxu0 0.0
    %700 = vmatpush1.msra.mxu0 %v363
    %701 = vmatprep.subr.mxu0 0.0
    %702 = vmatpush1.msra.mxu0 %v364
    %703 = vmatprep.subr.mxu0 0.0
    %704 = vmatpush1.msra.mxu0 %v365
    %705 = vmatprep.subr.mxu0 0.0
    %706 = vmatpush1.msra.mxu0 0.0
    %707 = vmatprep.subr.mxu0 0.0
    %708 = vmatpush1.msra.mxu0 0.0
    %709 = vmatprep.subr.mxu0 0.0
    %710 = vmatpush1.msra.mxu0 0.0
    %711 = vmatprep.subr.mxu0 0.0
    %712 = vmatpush1.msra.mxu0 0.0
    %713 = vmatprep.subr.mxu0 0.0
    %714 = vmatpush1.msra.mxu0 0.0
    %715 = vmatprep.subr.mxu0 0.0
    %716 = vmatpush1.msra.mxu0 0.0
    %717 = vmatprep.subr.mxu0 0.0
    %718 = vmatpush1.msra.mxu0 0.0
    %719 = vmatprep.subr.mxu0 0.0
    %720 = vmatpush1.msra.mxu0 0.0
    %721 = vmatprep.subr.mxu0 0.0
    %722 = vmatpush1.msra.mxu0 0.0
    %723 = vmatprep.subr.mxu0 0.0
    %724 = vmatpush1.msra.mxu0 0.0
    %725 = vmatprep.subr.mxu0 0.0
    %726 = vmatpush1.msra.mxu0 0.0
    %727 = vmatprep.subr.mxu0 0.0
    %728 = vmatpush1.msra.mxu0 0.0
    %729 = vmatprep.subr.mxu0 0.0
    %730 = vmatpush1.msra.mxu0 0.0
    %731 = vmatprep.subr.mxu0 0.0
    %732 = vmatpush1.msra.mxu0 0.0
    %733 = vmatprep.subr.mxu0 0.0
    %734 = vmatpush1.msra.mxu0 0.0
    %735 = vmatprep.subr.mxu0 0.0
    %736 = vmatpush1.msra.mxu0 0.0
    %737 = vmatprep.mubr.f32.mxu0 0.0
    %738 = vmatmul.mubr.f32.gmra.mrb[0].mxu0 %v671
    %v739 = vpop.f32.mrb[0].mxu0
    %v740 = vadd.f32 0.0, %v739
    %v741 = vpop.f32.mrb[0].mxu0
    %742 = vdwg.mxu0
    %v744 = vrot.slane %v740, 4
    %v746 = vadd.f32 %v237, %v744
    %v747 = vtanh.pop %v746
    %v749 = vrot.slane %v747, 4
    %751 = vmatprep.subr.mxu0 0.0
    %752 = vmatpush1.msra.mxu0 %v350
    %753 = vmatprep.subr.mxu0 0.0
    %754 = vmatpush1.msra.mxu0 %v351
    %755 = vmatprep.subr.mxu0 0.0
    %756 = vmatpush1.msra.mxu0 %v352
    %757 = vmatprep.subr.mxu0 0.0
    %758 = vmatpush1.msra.mxu0 %v353
    %759 = vmatprep.subr.mxu0 0.0
    %760 = vmatpush1.msra.mxu0 %v354
    %761 = vmatprep.subr.mxu0 0.0
    %762 = vmatpush1.msra.mxu0 %v355
    %763 = vmatprep.subr.mxu0 0.0
    %764 = vmatpush1.msra.mxu0 %v356
    %765 = vmatprep.subr.mxu0 0.0
    %766 = vmatpush1.msra.mxu0 %v357
    %767 = vmatprep.subr.mxu0 0.0
    %768 = vmatpush1.msra.mxu0 %v358
    %769 = vmatprep.subr.mxu0 0.0
    %770 = vmatpush1.msra.mxu0 %v359
    %771 = vmatprep.subr.mxu0 0.0
    %772 = vmatpush1.msra.mxu0 %v360
    %773 = vmatprep.subr.mxu0 0.0
    %774 = vmatpush1.msra.mxu0 %v361
    %775 = vmatprep.subr.mxu0 0.0
    %776 = vmatpush1.msra.mxu0 %v362
    %777 = vmatprep.subr.mxu0 0.0
    %778 = vmatpush1.msra.mxu0 %v363
    %779 = vmatprep.subr.mxu0 0.0
    %780 = vmatpush1.msra.mxu0 %v364
    %781 = vmatprep.subr.mxu0 0.0
    %782 = vmatpush1.msra.mxu0 %v365
    %783 = vmatprep.subr.mxu0 0.0
    %784 = vmatpush1.msra.mxu0 0.0
    %785 = vmatprep.subr.mxu0 0.0
    %786 = vmatpush1.msra.mxu0 0.0
    %787 = vmatprep.subr.mxu0 0.0
    %788 = vmatpush1.msra.mxu0 0.0
    %789 = vmatprep.subr.mxu0 0.0
    %790 = vmatpush1.msra.mxu0 0.0
    %791 = vmatprep.subr.mxu0 0.0
    %792 = vmatpush1.msra.mxu0 0.0
    %793 = vmatprep.subr.mxu0 0.0
    %794 = vmatpush1.msra.mxu0 0.0
    %795 = vmatprep.subr.mxu0 0.0
    %796 = vmatpush1.msra.mxu0 0.0
    %797 = vmatprep.subr.mxu0 0.0
    %798 = vmatpush1.msra.mxu0 0.0
    %799 = vmatprep.subr.mxu0 0.0
    %800 = vmatpush1.msra.mxu0 0.0
    %801 = vmatprep.subr.mxu0 0.0
    %802 = vmatpush1.msra.mxu0 0.0
    %803 = vmatprep.subr.mxu0 0.0
    %804 = vmatpush1.msra.mxu0 0.0
    %805 = vmatprep.subr.mxu0 0.0
    %806 = vmatpush1.msra.mxu0 0.0
    %807 = vmatprep.subr.mxu0 0.0
    %808 = vmatpush1.msra.mxu0 0.0
    %809 = vmatprep.subr.mxu0 0.0
    %810 = vmatpush1.msra.mxu0 0.0
    %811 = vmatprep.subr.mxu0 0.0
    %812 = vmatpush1.msra.mxu0 0.0
    %813 = vmatprep.subr.mxu0 0.0
    %814 = vmatpush1.msra.mxu0 0.0
    %815 = vmatprep.mubr.f32.mxu0 0.0
    %816 = vmatmul.mubr.f32.gmra.mrb[0].mxu0 %v749
    %v817 = vpop.f32.mrb[0].mxu0
    %v818 = vadd.f32 0.0, %v817
    %v819 = vpop.f32.mrb[0].mxu0
    %820 = vdwg.mxu0
    %v822 = vrot.slane %v818, 3
    %v824 = vadd.f32 %v237, %v822
    %v825 = vtanh.pop %v824
    %v827 = vrot.slane %v825, 5
    %829 = vmatprep.subr.mxu0 0.0
    %830 = vmatpush1.msra.mxu0 %v350
    %831 = vmatprep.subr.mxu0 0.0
    %832 = vmatpush1.msra.mxu0 %v351
    %833 = vmatprep.subr.mxu0 0.0
    %834 = vmatpush1.msra.mxu0 %v352
    %835 = vmatprep.subr.mxu0 0.0
    %836 = vmatpush1.msra.mxu0 %v353
    %837 = vmatprep.subr.mxu0 0.0
    %838 = vmatpush1.msra.mxu0 %v354
    %839 = vmatprep.subr.mxu0 0.0
    %840 = vmatpush1.msra.mxu0 %v355
    %841 = vmatprep.subr.mxu0 0.0
    %842 = vmatpush1.msra.mxu0 %v356
    %843 = vmatprep.subr.mxu0 0.0
    %844 = vmatpush1.msra.mxu0 %v357
    %845 = vmatprep.subr.mxu0 0.0
    %846 = vmatpush1.msra.mxu0 %v358
    %847 = vmatprep.subr.mxu0 0.0
    %848 = vmatpush1.msra.mxu0 %v359
    %849 = vmatprep.subr.mxu0 0.0
    %850 = vmatpush1.msra.mxu0 %v360
    %851 = vmatprep.subr.mxu0 0.0
    %852 = vmatpush1.msra.mxu0 %v361
    %853 = vmatprep.subr.mxu0 0.0
    %854 = vmatpush1.msra.mxu0 %v362
    %855 = vmatprep.subr.mxu0 0.0
    %856 = vmatpush1.msra.mxu0 %v363
    %857 = vmatprep.subr.mxu0 0.0
    %858 = vmatpush1.msra.mxu0 %v364
    %859 = vmatprep.subr.mxu0 0.0
    %860 = vmatpush1.msra.mxu0 %v365
    %861 = vmatprep.subr.mxu0 0.0
    %862 = vmatpush1.msra.mxu0 0.0
    %863 = vmatprep.subr.mxu0 0.0
    %864 = vmatpush1.msra.mxu0 0.0
    %865 = vmatprep.subr.mxu0 0.0
    %866 = vmatpush1.msra.mxu0 0.0
    %867 = vmatprep.subr.mxu0 0.0
    %868 = vmatpush1.msra.mxu0 0.0
    %869 = vmatprep.subr.mxu0 0.0
    %870 = vmatpush1.msra.mxu0 0.0
    %871 = vmatprep.subr.mxu0 0.0
    %872 = vmatpush1.msra.mxu0 0.0
    %873 = vmatprep.subr.mxu0 0.0
    %874 = vmatpush1.msra.mxu0 0.0
    %875 = vmatprep.subr.mxu0 0.0
    %876 = vmatpush1.msra.mxu0 0.0
    %877 = vmatprep.subr.mxu0 0.0
    %878 = vmatpush1.msra.mxu0 0.0
    %879 = vmatprep.subr.mxu0 0.0
    %880 = vmatpush1.msra.mxu0 0.0
    %881 = vmatprep.subr.mxu0 0.0
    %882 = vmatpush1.msra.mxu0 0.0
    %883 = vmatprep.subr.mxu0 0.0
    %884 = vmatpush1.msra.mxu0 0.0
    %885 = vmatprep.subr.mxu0 0.0
    %886 = vmatpush1.msra.mxu0 0.0
    %887 = vmatprep.subr.mxu0 0.0
    %888 = vmatpush1.msra.mxu0 0.0
    %889 = vmatprep.subr.mxu0 0.0
    %890 = vmatpush1.msra.mxu0 0.0
    %891 = vmatprep.subr.mxu0 0.0
    %892 = vmatpush1.msra.mxu0 0.0
    %893 = vmatprep.mubr.f32.mxu0 0.0
    %894 = vmatmul.mubr.f32.gmra.mrb[0].mxu0 %v827
    %v895 = vpop.f32.mrb[0].mxu0
    %v896 = vadd.f32 0.0, %v895
    %v897 = vpop.f32.mrb[0].mxu0
    %898 = vdwg.mxu0
    %v900 = vrot.slane %v896, 2
    %v902 = vadd.f32 %v237, %v900
    %v903 = vtanh.pop %v902
    %v905 = vrot.slane %v903, 6
    %907 = vmatprep.subr.mxu0 0.0
    %908 = vmatpush1.msra.mxu0 %v350
    %909 = vmatprep.subr.mxu0 0.0
    %910 = vmatpush1.msra.mxu0 %v351
    %911 = vmatprep.subr.mxu0 0.0
    %912 = vmatpush1.msra.mxu0 %v352
    %913 = vmatprep.subr.mxu0 0.0
    %914 = vmatpush1.msra.mxu0 %v353
    %915 = vmatprep.subr.mxu0 0.0
    %916 = vmatpush1.msra.mxu0 %v354
    %917 = vmatprep.subr.mxu0 0.0
    %918 = vmatpush1.msra.mxu0 %v355
    %919 = vmatprep.subr.mxu0 0.0
    %920 = vmatpush1.msra.mxu0 %v356
    %921 = vmatprep.subr.mxu0 0.0
    %922 = vmatpush1.msra.mxu0 %v357
    %923 = vmatprep.subr.mxu0 0.0
    %924 = vmatpush1.msra.mxu0 %v358
    %925 = vmatprep.subr.mxu0 0.0
    %926 = vmatpush1.msra.mxu0 %v359
    %927 = vmatprep.subr.mxu0 0.0
    %928 = vmatpush1.msra.mxu0 %v360
    %929 = vmatprep.subr.mxu0 0.0
    %930 = vmatpush1.msra.mxu0 %v361
    %931 = vmatprep.subr.mxu0 0.0
    %932 = vmatpush1.msra.mxu0 %v362
    %933 = vmatprep.subr.mxu0 0.0
    %934 = vmatpush1.msra.mxu0 %v363
    %935 = vmatprep.subr.mxu0 0.0
    %936 = vmatpush1.msra.mxu0 %v364
    %937 = vmatprep.subr.mxu0 0.0
    %938 = vmatpush1.msra.mxu0 %v365
    %939 = vmatprep.subr.mxu0 0.0
    %940 = vmatpush1.msra.mxu0 0.0
    %941 = vmatprep.subr.mxu0 0.0
    %942 = vmatpush1.msra.mxu0 0.0
    %943 = vmatprep.subr.mxu0 0.0
    %944 = vmatpush1.msra.mxu0 0.0
    %945 = vmatprep.subr.mxu0 0.0
    %946 = vmatpush1.msra.mxu0 0.0
    %947 = vmatprep.subr.mxu0 0.0
    %948 = vmatpush1.msra.mxu0 0.0
    %949 = vmatprep.subr.mxu0 0.0
    %950 = vmatpush1.msra.mxu0 0.0
    %951 = vmatprep.subr.mxu0 0.0
    %952 = vmatpush1.msra.mxu0 0.0
    %953 = vmatprep.subr.mxu0 0.0
    %954 = vmatpush1.msra.mxu0 0.0
    %955 = vmatprep.subr.mxu0 0.0
    %956 = vmatpush1.msra.mxu0 0.0
    %957 = vmatprep.subr.mxu0 0.0
    %958 = vmatpush1.msra.mxu0 0.0
    %959 = vmatprep.subr.mxu0 0.0
    %960 = vmatpush1.msra.mxu0 0.0
    %961 = vmatprep.subr.mxu0 0.0
    %962 = vmatpush1.msra.mxu0 0.0
    %963 = vmatprep.subr.mxu0 0.0
    %964 = vmatpush1.msra.mxu0 0.0
    %965 = vmatprep.subr.mxu0 0.0
    %966 = vmatpush1.msra.mxu0 0.0
    %967 = vmatprep.subr.mxu0 0.0
    %968 = vmatpush1.msra.mxu0 0.0
    %969 = vmatprep.subr.mxu0 0.0
    %970 = vmatpush1.msra.mxu0 0.0
    %971 = vmatprep.mubr.f32.mxu0 0.0
    %972 = vmatmul.mubr.f32.gmra.mrb[0].mxu0 %v905
    %v973 = vpop.f32.mrb[0].mxu0
    %v974 = vadd.f32 0.0, %v973
    %v975 = vpop.f32.mrb[0].mxu0
    %976 = vdwg.mxu0
    %v978 = vrot.slane %v974, 1
    %v980 = vadd.f32 %v237, %v978
    %v981 = vtanh.pop %v980
    %vm982 = vcmask 1040384
    %v983 = vsel %vm982, %v438, %v513
    %vm984 = vcmask 1041408
    %v985 = vsel %vm984, %v983, %v591
    %v986 = vsel %vm92, %v985, %v669
    %vm987 = vcmask 1043456
    %v988 = vsel %vm987, %v986, %v747
    %vm989 = vcmask 1044480
    %v990 = vsel %vm989, %v988, %v825
    %vm991 = vcmask 1045504
    %v992 = vsel %vm991, %v990, %v903
    %vm993 = vcmask 1046528
    %v994 = vsel %vm993, %v992, %v981
    %v995 = vld [vmem:[#allocation6] sm:$0xff]
    %v996 = vld [vmem:[#allocation6 + $0x8] sm:$0xff]
    %v997 = vld [vmem:[#allocation6 + $0x10] sm:$0xff]
    %v998 = vld [vmem:[#allocation6 + $0x18] sm:$0xff]
    %v999 = vld [vmem:[#allocation6 + $0x20] sm:$0xff]
    %v1000 = vld [vmem:[#allocation6 + $0x28] sm:$0xff]
    %v1001 = vld [vmem:[#allocation6 + $0x30] sm:$0xff]
    %v1002 = vld [vmem:[#allocation6 + $0x38] sm:$0xff]
    %v1003 = vld [vmem:[#allocation6 + $0x40] sm:$0xff]
    %v1004 = vld [vmem:[#allocation6 + $0x48] sm:$0xff]
    %v1005 = vld [vmem:[#allocation6 + $0x50] sm:$0xff]
    %v1006 = vld [vmem:[#allocation6 + $0x58] sm:$0xff]
    %v1007 = vld [vmem:[#allocation6 + $0x60] sm:$0xff]
    %v1008 = vld [vmem:[#allocation6 + $0x68] sm:$0xff]
    %v1009 = vld [vmem:[#allocation6 + $0x70] sm:$0xff]
    %v1010 = vld [vmem:[#allocation6 + $0x78] sm:$0xff]
    %v1011 = vld [vmem:[#allocation6 + $0x80] sm:$0xff]
    %v1012 = vld [vmem:[#allocation6 + $0x88] sm:$0xff]
    %v1013 = vld [vmem:[#allocation6 + $0x90] sm:$0xff]
    %v1014 = vld [vmem:[#allocation6 + $0x98] sm:$0xff]
    %v1015 = vld [vmem:[#allocation6 + $0xa0] sm:$0xff]
    %v1016 = vld [vmem:[#allocation6 + $0xa8] sm:$0xff]
    %v1017 = vld [vmem:[#allocation6 + $0xb0] sm:$0xff]
    %v1018 = vld [vmem:[#allocation6 + $0xb8] sm:$0xff]
    %v1019 = vld [vmem:[#allocation6 + $0xc0] sm:$0xff]
    %v1020 = vld [vmem:[#allocation6 + $0xc8] sm:$0xff]
    %v1021 = vld [vmem:[#allocation6 + $0xd0] sm:$0xff]
    %v1022 = vld [vmem:[#allocation6 + $0xd8] sm:$0xff]
    %v1023 = vld [vmem:[#allocation6 + $0xe0] sm:$0xff]
    %v1024 = vld [vmem:[#allocation6 + $0xe8] sm:$0xff]
    %v1025 = vld [vmem:[#allocation6 + $0xf0] sm:$0xff]
    %v1026 = vld [vmem:[#allocation6 + $0xf8] sm:$0xff]
    %v1027 = vld [vmem:[#allocation6 + $0x100] sm:$0x1]
    %v1028 = vlaneseq
    %v1029 = vshrl.u32 %v1028, 7
    %v1030 = vsub.s32 0, %v1029
    %v1031 = vrot.slane %v1027, %v1030
    %1032 = vmatprep.subr.mxu0 0.0
    %1033 = vmatpush1.msra.mxu0 %v995
    %1034 = vmatprep.subr.mxu0 0.0
    %1035 = vmatpush1.msra.mxu0 %v996
    %1036 = vmatprep.subr.mxu0 0.0
    %1037 = vmatpush1.msra.mxu0 %v997
    %1038 = vmatprep.subr.mxu0 0.0
    %1039 = vmatpush1.msra.mxu0 %v998
    %1040 = vmatprep.subr.mxu0 0.0
    %1041 = vmatpush1.msra.mxu0 %v999
    %1042 = vmatprep.subr.mxu0 0.0
    %1043 = vmatpush1.msra.mxu0 %v1000
    %1044 = vmatprep.subr.mxu0 0.0
    %1045 = vmatpush1.msra.mxu0 %v1001
    %1046 = vmatprep.subr.mxu0 0.0
    %1047 = vmatpush1.msra.mxu0 %v1002
    %1048 = vmatprep.subr.mxu0 0.0
    %1049 = vmatpush1.msra.mxu0 %v1003
    %1050 = vmatprep.subr.mxu0 0.0
    %1051 = vmatpush1.msra.mxu0 %v1004
    %1052 = vmatprep.subr.mxu0 0.0
    %1053 = vmatpush1.msra.mxu0 %v1005
    %1054 = vmatprep.subr.mxu0 0.0
    %1055 = vmatpush1.msra.mxu0 %v1006
    %1056 = vmatprep.subr.mxu0 0.0
    %1057 = vmatpush1.msra.mxu0 %v1007
    %1058 = vmatprep.subr.mxu0 0.0
    %1059 = vmatpush1.msra.mxu0 %v1008
    %1060 = vmatprep.subr.mxu0 0.0
    %1061 = vmatpush1.msra.mxu0 %v1009
    %1062 = vmatprep.subr.mxu0 0.0
    %1063 = vmatpush1.msra.mxu0 %v1010
    %1064 = vmatprep.subr.mxu0 0.0
    %1065 = vmatpush1.msra.mxu0 %v1011
    %1066 = vmatprep.subr.mxu0 0.0
    %1067 = vmatpush1.msra.mxu0 %v1012
    %1068 = vmatprep.subr.mxu0 0.0
    %1069 = vmatpush1.msra.mxu0 %v1013
    %1070 = vmatprep.subr.mxu0 0.0
    %1071 = vmatpush1.msra.mxu0 %v1014
    %1072 = vmatprep.subr.mxu0 0.0
    %1073 = vmatpush1.msra.mxu0 %v1015
    %1074 = vmatprep.subr.mxu0 0.0
    %1075 = vmatpush1.msra.mxu0 %v1016
    %1076 = vmatprep.subr.mxu0 0.0
    %1077 = vmatpush1.msra.mxu0 %v1017
    %1078 = vmatprep.subr.mxu0 0.0
    %1079 = vmatpush1.msra.mxu0 %v1018
    %1080 = vmatprep.subr.mxu0 0.0
    %1081 = vmatpush1.msra.mxu0 %v1019
    %1082 = vmatprep.subr.mxu0 0.0
    %1083 = vmatpush1.msra.mxu0 %v1020
    %1084 = vmatprep.subr.mxu0 0.0
    %1085 = vmatpush1.msra.mxu0 %v1021
    %1086 = vmatprep.subr.mxu0 0.0
    %1087 = vmatpush1.msra.mxu0 %v1022
    %1088 = vmatprep.subr.mxu0 0.0
    %1089 = vmatpush1.msra.mxu0 %v1023
    %1090 = vmatprep.subr.mxu0 0.0
    %1091 = vmatpush1.msra.mxu0 %v1024
    %1092 = vmatprep.subr.mxu0 0.0
    %1093 = vmatpush1.msra.mxu0 %v1025
    %1094 = vmatprep.subr.mxu0 0.0
    %1095 = vmatpush1.msra.mxu0 %v1026
    %1096 = vmatprep.mubr.f32.mxu0 %v994
    %1097 = vmatmul.mubr.f32.gmra.mrb[0].mxu0 %v349
    %v1098 = vpop.f32.mrb[0].mxu0
    %v1099 = vadd.f32 %v1031, %v1098
    %v1100 = vpop.f32.mrb[0].mxu0
    %1101 = vdwg.mxu0
    %v1102 = vtanh.pop %v1099
    %v1103 = vmul.f32 %v1102, 2.0
    %vm1104 = vcmp.gt.f32.partialorder %v1099, 20.0
    %v1105 = vmin.f32 %v1099, 20.0
    %v1106 = vmul.f32 %v1105, 1.442695
    %v1107 = vpow.pop %v1106
    %v1108 = vadd.f32 %v1107, 1.0
    %v1109 = vlog2.pop %v1108
    %v1110 = vmul.f32 %v1109, 0.6931472
    %v1111 = vmul.f32 -0.5, %v1107
    %v1112 = vadd.f32 %v1111, 1.0
    %v1113 = vmul.f32 %v1112, %v1107
    %v1114 = vand.u32 2147483647, %v1107
    %vm1115 = vcmp.lt.f32.partialorder %v1114, 0.0004427343
    %v1116 = vsel %vm1115, %v1113, %v1110
    %v1117 = vsel %vm1104, %v1099, %v1116
    %v1118 = vadd.f32 %v1117, 0.001
    %v1119 = vlaneseq
    %v1120 = vand.u32 %v1119, 127
    %vm1121 = vcmp.eq.s32.totalorder %v1120, 0
    %vm1122 = vcmp.eq.s32.totalorder %v1120, 1
    %v1123 = vsel %vm1122, %v1118, %v1099
    %v1124 = vsel %vm1121, %v1103, %v1123
    %1125 = vst [vmem:[%s6] sm:$0xff] %v1124
    %v1126 = vlaneseq
    %v1127 = vshrl.u32 %v1126, 7
    %v1128 = vsub.s32 7, %v1127
    %v1129 = vrot.slane %v981, %v1128
    %1130 = vst [vmem:[%s6 + $0x8] sm:$0xff] %v1129
    // Predicated region
    $region38: #{_a3c_forward_impl.1} parent=1 // pred_check
      _
    $region39: #{_a3c_forward_impl.1} parent=1 // pred_check_branch
      %1132 = sbr.rel (0) target = $region41
    $region40: #{_a3c_forward_impl.1} parent=1 // pred_region
      _
    $region41: #{_a3c_forward_impl.1} parent=1 // pred_fallthru
      _
    // Predicated region
    $region42: #{_a3c_forward_impl.1} parent=1 // pred_check
      _
    $region43: #{_a3c_forward_impl.1} parent=1 // pred_check_branch
      %1134 = sbr.rel (0) target = $region45
    $region44: #{_a3c_forward_impl.1} parent=1 // pred_region
      _
    $region45: #{_a3c_forward_impl.1} parent=1 // pred_fallthru
      _
    %1135 = vsyncpa [#allocation3], 1
    %1136 = vsyncpa [#allocation5], 1

</llo_original>
